<compile_context>
chip_gen: v7x
topology: tpu7x:2x2x1
jax: 0.10.0
libtpu: 0.0.40
codegen_flags: <defaults>
</compile_context>

<pallas_src>
import math

import jax
import jax.numpy as jnp
from jax.experimental import pallas as pl
from jax.experimental.pallas import tpu as pltpu


def _scatter_kernel(sw_ref, x_ref, o_ref):
    # x_ref: (tb*H, W) input rows, plane-major.
    # sw_ref: (W, sH*W_out) one-hot lane-scatter matrix (resident in VMEM).
    # o_ref: (tb*H, sH*W_out) -- one dense store, every byte written once.
    o_ref[...] = jnp.dot(
        x_ref[...], sw_ref[...], preferred_element_type=jnp.float32
    ).astype(o_ref.dtype)


def _copy_kernel(x_ref, o_ref):
    o_ref[...] = x_ref[...]


def _round_up(v, m):
    return -(-v // m) * m


def _divisors(n):
    ds = set()
    for d in range(1, int(math.isqrt(n)) + 1):
        if n % d == 0:
            ds.add(d)
            ds.add(n // d)
    return sorted(ds)


def zero_upsampling(x, upsampling_factor):
    """Pallas-TPU equivalent of ZeroUpsampling(C, uf).forward(x); x is NCHW."""
    N, C, H, W = x.shape
    sH, sW = int(upsampling_factor[0]), int(upsampling_factor[1])  # conv_t stride
    kH, kW = int(upsampling_factor[1]), int(upsampling_factor[0])  # kernel dims
    H_out = (H - 1) * sH + kH
    W_out = (W - 1) * sW + kW
    Hs = H * sH                      # canvas rows per plane produced by the kernel

    NC = N * C
    itemsize = jnp.dtype(x.dtype).itemsize
    sub = {4: 8, 2: 16, 1: 32}.get(itemsize, 8)          # dtype sublane tile

    # TODO(synk): integer inputs should bypass the MXU (no int MXU on v7x);
    # this path targets f32/bf16, where 0/1 multipliers are bit-exact.
    pure_copy = (sH == 1 and sW == 1 and kW == 1)        # uf == (1, 1)
    group_w = W if pure_copy else sH * W_out             # output lanes per input row

    # ---- VMEM-aware block sizing, using physically padded tile bytes. ----
    w_in_pad = _round_up(W, 128)
    w_out_pad = _round_up(group_w, 128)
    sw_pad_bytes = 0 if pure_copy else _round_up(W, sub) * w_out_pad * itemsize

    VMEM_LIMIT = 32 * 1024 * 1024
    # Per-step (input + output) padded block budget; x2 double buffering plus
    # the resident scatter matrix plus compiler slack must fit the limit.
    budget = max(1 << 20, (VMEM_LIMIT - 2 * sw_pad_bytes - (4 << 20)) // 2)

    def block_bytes(tb):
        rows = _round_up(tb * H, sub)
        return rows * (w_in_pad + w_out_pad) * itemsize

    row_bytes = (w_in_pad + w_out_pad) * itemsize
    tb_cap = max(1, (budget // row_bytes) // H)
    while tb_cap > 1 and block_bytes(tb_cap) > budget:
        tb_cap -= 1

    # tb*H must be a multiple of the sublane tile unless the block spans the
    # whole array in that dim (tb == NC with no padding).
    align = sub // math.gcd(H, sub)

    cands = [d for d in _divisors(NC)
             if d <= tb_cap and (d % align == 0 or d == NC)]
    if cands:
        tb = max(cands)
        nc_pad = NC
        if tb == NC:
            # v7x megacore balance: prefer >= 2 grid steps, but only when the
            # per-step block is still >= 1 MiB (else per-step overhead wins).
            multi = [d for d in cands if d < NC and block_bytes(d) >= (1 << 20)]
            if multi:
                even = [d for d in multi if (NC // d) % 2 == 0]
                tb = max(even) if even else max(multi)
    else:
        # Rare fallback: no suitable divisor of NC -> pad with zero planes.
        tb = max(align, (tb_cap // align) * align)
        while tb > align and block_bytes(tb) > budget:
            tb -= align
        nc_pad = _round_up(NC, tb)

    xf = x.reshape(NC, H, W)
    if nc_pad != NC:
        xf = jnp.concatenate(
            [xf, jnp.zeros((nc_pad - NC, H, W), x.dtype)], axis=0)
    x2 = xf.reshape(nc_pad * H, W)           # plane-major rows; contiguous (free)

    grid = (nc_pad // tb,)
    out_shape = jax.ShapeDtypeStruct((nc_pad * H, group_w), x.dtype)
    out_spec = pl.BlockSpec((tb * H, group_w), lambda i: (i, 0))
    in_bytes = nc_pad * H * W * itemsize
    out_bytes = nc_pad * H * group_w * itemsize
    cparams = pltpu.CompilerParams(
        dimension_semantics=("parallel",),
        vmem_limit_bytes=VMEM_LIMIT)

    if pure_copy:
        core2d = pl.pallas_call(
            _copy_kernel,
            out_shape=out_shape,
            grid_spec=pltpu.PrefetchScalarGridSpec(
                num_scalar_prefetch=0,
                grid=grid,
                in_specs=[pl.BlockSpec((tb * H, W), lambda i: (i, 0))],
                out_specs=out_spec,
            ),
            compiler_params=cparams,
            cost_estimate=pl.CostEstimate(
                flops=0, transcendentals=0,
                bytes_accessed=in_bytes + out_bytes),
        )(x2)
    else:
        # One-hot lane-scatter matrix sw[j, j*sW] = 1 (columns >= W_out and the
        # other sH-1 sub-rows of each group stay zero).  Built once per call,
        # DMA'd once, and kept resident via the constant index_map.
        rows = jax.lax.broadcasted_iota(jnp.int32, (W, group_w), 0)
        cols = jax.lax.broadcasted_iota(jnp.int32, (W, group_w), 1)
        sw = (cols == rows * sW).astype(x.dtype)

        core2d = pl.pallas_call(
            _scatter_kernel,
            out_shape=out_shape,
            grid_spec=pltpu.PrefetchScalarGridSpec(
                num_scalar_prefetch=0,
                grid=grid,
                in_specs=[pl.BlockSpec((W, group_w), lambda i: (0, 0)),
                          pl.BlockSpec((tb * H, W), lambda i: (i, 0))],
                out_specs=out_spec,
            ),
            compiler_params=cparams,
            cost_estimate=pl.CostEstimate(
                flops=2 * nc_pad * H * W * group_w,
                transcendentals=0,
                bytes_accessed=in_bytes + out_bytes + W * group_w * itemsize),
        )(sw, x2)

    # (nc_pad*H, sH*W_out) -> (nc_pad, H*sH, W_out): contiguous (free) reshape;
    # each group of sH canvas rows was laid out contiguously along lanes.
    core = core2d.reshape(nc_pad, Hs, W_out)[:NC]

    if kH == sH:                       # square factors (incl. the demo): no-op
        out = core
    elif kH > sH:                      # append (kH - sH) all-zero rows per plane
        out = jnp.pad(core, ((0, 0), (0, kH - sH), (0, 0)))
    else:                              # drop trailing (all-zero) canvas rows
        out = core[:, :H_out, :]
    return out.reshape(N, C, H_out, W_out)


if __name__ == "__main__":
    key = jax.random.PRNGKey(0)
    N, C, H, W = 2, 4, 16, 16
    upsampling_factor = (2, 2)
    x = jax.random.normal(key, (N, C, H, W), dtype=jnp.float32)

    y = jax.block_until_ready(zero_upsampling(x, upsampling_factor))

    # Pure-JAX reference: scatter x at strided positions of a zero canvas.
    sH, sW = upsampling_factor[0], upsampling_factor[1]
    kH, kW = upsampling_factor[1], upsampling_factor[0]
    H_out = (H - 1) * sH + kH
    W_out = (W - 1) * sW + kW
    ref = jnp.zeros((N, C, H_out, W_out), jnp.float32).at[
        :, :, 0:(H - 1) * sH + 1:sH, 0:(W - 1) * sW + 1:sW].set(x)

    assert y.shape == (N, C, H_out, W_out), y.shape
    assert jnp.allclose(y, ref, atol=1e-6), "mismatch vs reference"

    print("KERNEL_OK")
</pallas_src>

<mosaic_0001>
module attributes {stable_mosaic.version = 11 : i64} {
  func.func @_scatter_kernel(%arg0: i32, %arg1: memref<16x64xf32, #tpu.memory_space<vmem>>, %arg2: memref<128x16xf32, #tpu.memory_space<vmem>>, %arg3: memref<128x64xf32, #tpu.memory_space<vmem>>) attributes {dimension_semantics = [#tpu.dimension_semantics<parallel>], iteration_bounds = array<i64: 1>, scalar_prefetch = 0 : i64, scratch_operands = 0 : i64, tpu.core_type = #tpu.core_type<tc>, window_params = [{pipeline_mode = #tpu.pipeline_mode<synchronous>, transform_indices = @transform_0, window_bounds = array<i64: 16, 64>}, {transform_indices = @transform_1, window_bounds = array<i64: 128, 16>}, {transform_indices = @transform_2, window_bounds = array<i64: 128, 64>}]} {
    %c0 = arith.constant 0 : index
    %c0_0 = arith.constant 0 : index
    %0 = vector.load %arg2[%c0, %c0_0] : memref<128x16xf32, #tpu.memory_space<vmem>>, vector<128x16xf32>
    %c0_1 = arith.constant 0 : index
    %c0_2 = arith.constant 0 : index
    %1 = vector.load %arg1[%c0_1, %c0_2] : memref<16x64xf32, #tpu.memory_space<vmem>>, vector<16x64xf32>
    %cst = arith.constant dense<0.000000e+00> : vector<128x64xf32>
    %2 = tpu.matmul %0, %1, %cst {dimension_numbers = #tpu.dot_dimension_numbers<[1], [0], [0], [1], [0, 0, 1, 1], [], []>} : vector<128x16xf32>, vector<16x64xf32>, vector<128x64xf32> -> vector<128x64xf32>
    %c0_3 = arith.constant 0 : index
    %c0_4 = arith.constant 0 : index
    %3 = vector.load %arg3[%c0_3, %c0_4] : memref<128x64xf32, #tpu.memory_space<vmem>>, vector<128x64xf32>
    tpu.vector_store %arg3[%c0_3, %c0_4], %2 {strides = array<i32>} : memref<128x64xf32, #tpu.memory_space<vmem>>, vector<128x64xf32>,
    return
  }
  func.func @transform_0(%arg0: i32) -> (i32, i32) {
    %c0_i32 = arith.constant 0 : i32
    %c0_i32_0 = arith.constant 0 : i32
    %c0_i32_1 = arith.constant 0 : i32
    return %c0_i32, %c0_i32_0 : i32, i32
  }
  func.func @transform_1(%arg0: i32) -> (i32, i32) {
    %c0_i32 = arith.constant 0 : i32
    %c0_i32_0 = arith.constant 0 : i32
    return %arg0, %c0_i32 : i32, i32
  }
  func.func @transform_2(%arg0: i32) -> (i32, i32) {
    %c0_i32 = arith.constant 0 : i32
    %c0_i32_0 = arith.constant 0 : i32
    return %arg0, %c0_i32 : i32, i32
  }
}

</mosaic_0001>

<llo_original>
// kernel: tpu_custom_call.1
$region0: #{tpu_custom_call.1}
  #allocation0 [shape = 'u32[]', space=smem, size = 0x4, offset = 0x4, fixed_abs, tag = 'smem constant byte address 0x4 - core index']
  #allocation1 [shape = 'u32[144,128]{1,0:T(1,128)}', space=vmem, size = 0x12000, scoped, tag = 'internal scratch']
  %s0 = inlined_call_operand.vmem [shape: f32[16,64], index: 0, kind: input, shape index: {}]
  %s1 = inlined_call_operand.vmem [shape: f32[128,16], index: 1, kind: input, shape index: {}]
  %s2 = inlined_call_operand.vmem [shape: f32[128,64], index: 2, kind: output, shape index: {}]
  %s3 = sld [smem:[#allocation0]]
  $region18: #{tpu_custom_call.1} parent=0
    _
  %s5 = ssub.s32 1, %s3
  %s6 = scalar_select 0, %s5, %s3
  // Predicated region
  $region2: #{tpu_custom_call.1} parent=0 // pred_check
    _
  $region3: #{tpu_custom_call.1} parent=0 // pred_check_branch
    %8 = sbr.rel (0) target = $region5
  $region4: #{tpu_custom_call.1} parent=0 // pred_region
    _
  $region5: #{tpu_custom_call.1} parent=0 // pred_fallthru
    _
  // Predicated region
  $region6: #{tpu_custom_call.1} parent=0 // pred_check
    _
  $region7: #{tpu_custom_call.1} parent=0 // pred_check_branch
    %10 = sbr.rel (0) target = $region9
  $region8: #{tpu_custom_call.1} parent=0 // pred_region
    _
  $region9: #{tpu_custom_call.1} parent=0 // pred_fallthru
    _
  %v11 = vld [vmem:[%s1] sm:$0xff]
  %v12 = vld [vmem:[%s1 + $0x8] sm:$0xff]
  %v13 = vld [vmem:[%s1 + $0x10] sm:$0xff]
  %v14 = vld [vmem:[%s1 + $0x18] sm:$0xff]
  %v15 = vld [vmem:[%s1 + $0x20] sm:$0xff]
  %v16 = vld [vmem:[%s1 + $0x28] sm:$0xff]
  %v17 = vld [vmem:[%s1 + $0x30] sm:$0xff]
  %v18 = vld [vmem:[%s1 + $0x38] sm:$0xff]
  %v19 = vld [vmem:[%s1 + $0x40] sm:$0xff]
  %v20 = vld [vmem:[%s1 + $0x48] sm:$0xff]
  %v21 = vld [vmem:[%s1 + $0x50] sm:$0xff]
  %v22 = vld [vmem:[%s1 + $0x58] sm:$0xff]
  %v23 = vld [vmem:[%s1 + $0x60] sm:$0xff]
  %v24 = vld [vmem:[%s1 + $0x68] sm:$0xff]
  %v25 = vld [vmem:[%s1 + $0x70] sm:$0xff]
  %v26 = vld [vmem:[%s1 + $0x78] sm:$0xff]
  %v27 = vld [vmem:[%s0] sm:$0xff]
  %v28 = vld [vmem:[%s0 + $0x8] sm:$0xff]
  %vm29 = vcmask 130048
  %v31 = vsel %vm29, %v11, 0
  %v34 = vsel %vm29, %v12, 0
  %v37 = vsel %vm29, %v13, 0
  %v40 = vsel %vm29, %v14, 0
  %v43 = vsel %vm29, %v15, 0
  %v46 = vsel %vm29, %v16, 0
  %v49 = vsel %vm29, %v17, 0
  %v52 = vsel %vm29, %v18, 0
  %v55 = vsel %vm29, %v19, 0
  %v58 = vsel %vm29, %v20, 0
  %v61 = vsel %vm29, %v21, 0
  %v64 = vsel %vm29, %v22, 0
  %v67 = vsel %vm29, %v23, 0
  %v70 = vsel %vm29, %v24, 0
  %v73 = vsel %vm29, %v25, 0
  %v76 = vsel %vm29, %v26, 0
  %78 = vmatprep.subr.mxu0 0.0
  %79 = vmatpush1.msra.mxu0 %v27
  %80 = vmatprep.subr.mxu0 0.0
  %81 = vmatpush1.msra.mxu0 %v28
  %82 = vmatprep.subr.mxu0 0.0
  %83 = vmatpush1.msra.mxu0 0.0
  %84 = vmatprep.subr.mxu0 0.0
  %85 = vmatpush1.msra.mxu0 0.0
  %86 = vmatprep.subr.mxu0 0.0
  %87 = vmatpush1.msra.mxu0 0.0
  %88 = vmatprep.subr.mxu0 0.0
  %89 = vmatpush1.msra.mxu0 0.0
  %90 = vmatprep.subr.mxu0 0.0
  %91 = vmatpush1.msra.mxu0 0.0
  %92 = vmatprep.subr.mxu0 0.0
  %93 = vmatpush1.msra.mxu0 0.0
  %94 = vmatprep.subr.mxu0 0.0
  %95 = vmatpush1.msra.mxu0 0.0
  %96 = vmatprep.subr.mxu0 0.0
  %97 = vmatpush1.msra.mxu0 0.0
  %98 = vmatprep.subr.mxu0 0.0
  %99 = vmatpush1.msra.mxu0 0.0
  %100 = vmatprep.subr.mxu0 0.0
  %101 = vmatpush1.msra.mxu0 0.0
  %102 = vmatprep.subr.mxu0 0.0
  %103 = vmatpush1.msra.mxu0 0.0
  %104 = vmatprep.subr.mxu0 0.0
  %105 = vmatpush1.msra.mxu0 0.0
  %106 = vmatprep.subr.mxu0 0.0
  %107 = vmatpush1.msra.mxu0 0.0
  %108 = vmatprep.subr.mxu0 0.0
  %109 = vmatpush1.msra.mxu0 0.0
  %110 = vmatprep.subr.mxu0 0.0
  %111 = vmatpush1.msra.mxu0 0.0
  %112 = vmatprep.subr.mxu0 0.0
  %113 = vmatpush1.msra.mxu0 0.0
  %114 = vmatprep.subr.mxu0 0.0
  %115 = vmatpush1.msra.mxu0 0.0
  %116 = vmatprep.subr.mxu0 0.0
  %117 = vmatpush1.msra.mxu0 0.0
  %118 = vmatprep.subr.mxu0 0.0
  %119 = vmatpush1.msra.mxu0 0.0
  %120 = vmatprep.subr.mxu0 0.0
  %121 = vmatpush1.msra.mxu0 0.0
  %122 = vmatprep.subr.mxu0 0.0
  %123 = vmatpush1.msra.mxu0 0.0
  %124 = vmatprep.subr.mxu0 0.0
  %125 = vmatpush1.msra.mxu0 0.0
  %126 = vmatprep.subr.mxu0 0.0
  %127 = vmatpush1.msra.mxu0 0.0
  %128 = vmatprep.subr.mxu0 0.0
  %129 = vmatpush1.msra.mxu0 0.0
  %130 = vmatprep.subr.mxu0 0.0
  %131 = vmatpush1.msra.mxu0 0.0
  %132 = vmatprep.subr.mxu0 0.0
  %133 = vmatpush1.msra.mxu0 0.0
  %134 = vmatprep.subr.mxu0 0.0
  %135 = vmatpush1.msra.mxu0 0.0
  %136 = vmatprep.subr.mxu0 0.0
  %137 = vmatpush1.msra.mxu0 0.0
  %138 = vmatprep.subr.mxu0 0.0
  %139 = vmatpush1.msra.mxu0 0.0
  %140 = vmatprep.subr.mxu0 0.0
  %141 = vmatpush1.msra.mxu0 0.0
  %142 = vmatprep.mubr.f32.mxu0 0.0
  %143 = vmatmul.mubr.f32.gmra.mrb[0].mxu0 %v31
  %v144 = vpop.f32.mrb[0].mxu0
  %v145 = vadd.f32 0.0, %v144
  %v146 = vpop.f32.mrb[0].mxu0
  %147 = vmatprep.mubr.f32.mxu0 0.0
  %148 = vmatmul.mubr.f32.gmra.mrb[0].mxu0 %v34
  %v149 = vpop.f32.mrb[0].mxu0
  %v150 = vadd.f32 0.0, %v149
  %v151 = vpop.f32.mrb[0].mxu0
  %152 = vmatprep.mubr.f32.mxu0 0.0
  %153 = vmatmul.mubr.f32.gmra.mrb[0].mxu0 %v37
  %v154 = vpop.f32.mrb[0].mxu0
  %v155 = vadd.f32 0.0, %v154
  %v156 = vpop.f32.mrb[0].mxu0
  %157 = vmatprep.mubr.f32.mxu0 0.0
  %158 = vmatmul.mubr.f32.gmra.mrb[0].mxu0 %v40
  %v159 = vpop.f32.mrb[0].mxu0
  %v160 = vadd.f32 0.0, %v159
  %v161 = vpop.f32.mrb[0].mxu0
  %162 = vmatprep.mubr.f32.mxu0 0.0
  %163 = vmatmul.mubr.f32.gmra.mrb[0].mxu0 %v43
  %v164 = vpop.f32.mrb[0].mxu0
  %v165 = vadd.f32 0.0, %v164
  %v166 = vpop.f32.mrb[0].mxu0
  %167 = vmatprep.mubr.f32.mxu0 0.0
  %168 = vmatmul.mubr.f32.gmra.mrb[0].mxu0 %v46
  %v169 = vpop.f32.mrb[0].mxu0
  %v170 = vadd.f32 0.0, %v169
  %v171 = vpop.f32.mrb[0].mxu0
  %172 = vmatprep.mubr.f32.mxu0 0.0
  %173 = vmatmul.mubr.f32.gmra.mrb[0].mxu0 %v49
  %v174 = vpop.f32.mrb[0].mxu0
  %v175 = vadd.f32 0.0, %v174
  %v176 = vpop.f32.mrb[0].mxu0
  %177 = vmatprep.mubr.f32.mxu0 0.0
  %178 = vmatmul.mubr.f32.gmra.mrb[0].mxu0 %v52
  %v179 = vpop.f32.mrb[0].mxu0
  %v180 = vadd.f32 0.0, %v179
  %v181 = vpop.f32.mrb[0].mxu0
  %182 = vmatprep.mubr.f32.mxu0 0.0
  %183 = vmatmul.mubr.f32.gmra.mrb[0].mxu0 %v55
  %v184 = vpop.f32.mrb[0].mxu0
  %v185 = vadd.f32 0.0, %v184
  %v186 = vpop.f32.mrb[0].mxu0
  %187 = vmatprep.mubr.f32.mxu0 0.0
  %188 = vmatmul.mubr.f32.gmra.mrb[0].mxu0 %v58
  %v189 = vpop.f32.mrb[0].mxu0
  %v190 = vadd.f32 0.0, %v189
  %v191 = vpop.f32.mrb[0].mxu0
  %192 = vmatprep.mubr.f32.mxu0 0.0
  %193 = vmatmul.mubr.f32.gmra.mrb[0].mxu0 %v61
  %v194 = vpop.f32.mrb[0].mxu0
  %v195 = vadd.f32 0.0, %v194
  %v196 = vpop.f32.mrb[0].mxu0
  %197 = vmatprep.mubr.f32.mxu0 0.0
  %198 = vmatmul.mubr.f32.gmra.mrb[0].mxu0 %v64
  %v199 = vpop.f32.mrb[0].mxu0
  %v200 = vadd.f32 0.0, %v199
  %v201 = vpop.f32.mrb[0].mxu0
  %202 = vmatprep.mubr.f32.mxu0 0.0
  %203 = vmatmul.mubr.f32.gmra.mrb[0].mxu0 %v67
  %v204 = vpop.f32.mrb[0].mxu0
  %v205 = vadd.f32 0.0, %v204
  %v206 = vpop.f32.mrb[0].mxu0
  %207 = vmatprep.mubr.f32.mxu0 0.0
  %208 = vmatmul.mubr.f32.gmra.mrb[0].mxu0 %v70
  %v209 = vpop.f32.mrb[0].mxu0
  %v210 = vadd.f32 0.0, %v209
  %v211 = vpop.f32.mrb[0].mxu0
  %212 = vmatprep.mubr.f32.mxu0 0.0
  %213 = vmatmul.mubr.f32.gmra.mrb[0].mxu0 %v73
  %v214 = vpop.f32.mrb[0].mxu0
  %v215 = vadd.f32 0.0, %v214
  %v216 = vpop.f32.mrb[0].mxu0
  %217 = vmatprep.mubr.f32.mxu0 0.0
  %218 = vmatmul.mubr.f32.gmra.mrb[0].mxu0 %v76
  %v219 = vpop.f32.mrb[0].mxu0
  %v220 = vadd.f32 0.0, %v219
  %v221 = vpop.f32.mrb[0].mxu0
  %222 = vdwg.mxu0
  %vm223 = vcmask 523264
  %224 = vst.msk [vmem:[%s2] sm:$0xff] %vm223, %v145
  %225 = vst.msk [vmem:[%s2 + $0x8] sm:$0xff] %vm223, %v150
  %226 = vst.msk [vmem:[%s2 + $0x10] sm:$0xff] %vm223, %v155
  %227 = vst.msk [vmem:[%s2 + $0x18] sm:$0xff] %vm223, %v160
  %228 = vst.msk [vmem:[%s2 + $0x20] sm:$0xff] %vm223, %v165
  %229 = vst.msk [vmem:[%s2 + $0x28] sm:$0xff] %vm223, %v170
  %230 = vst.msk [vmem:[%s2 + $0x30] sm:$0xff] %vm223, %v175
  %231 = vst.msk [vmem:[%s2 + $0x38] sm:$0xff] %vm223, %v180
  %232 = vst.msk [vmem:[%s2 + $0x40] sm:$0xff] %vm223, %v185
  %233 = vst.msk [vmem:[%s2 + $0x48] sm:$0xff] %vm223, %v190
  %234 = vst.msk [vmem:[%s2 + $0x50] sm:$0xff] %vm223, %v195
  %235 = vst.msk [vmem:[%s2 + $0x58] sm:$0xff] %vm223, %v200
  %236 = vst.msk [vmem:[%s2 + $0x60] sm:$0xff] %vm223, %v205
  %237 = vst.msk [vmem:[%s2 + $0x68] sm:$0xff] %vm223, %v210
  %238 = vst.msk [vmem:[%s2 + $0x70] sm:$0xff] %vm223, %v215
  %239 = vst.msk [vmem:[%s2 + $0x78] sm:$0xff] %vm223, %v220
  // Predicated region
  $region10: #{tpu_custom_call.1} parent=0 // pred_check
    _
  $region11: #{tpu_custom_call.1} parent=0 // pred_check_branch
    %241 = sbr.rel (0) target = $region13
  $region12: #{tpu_custom_call.1} parent=0 // pred_region
    _
  $region13: #{tpu_custom_call.1} parent=0 // pred_fallthru
    _
  // Predicated region
  $region14: #{tpu_custom_call.1} parent=0 // pred_check
    _
  $region15: #{tpu_custom_call.1} parent=0 // pred_check_branch
    %243 = sbr.rel (0) target = $region17
  $region16: #{tpu_custom_call.1} parent=0 // pred_region
    _
  $region17: #{tpu_custom_call.1} parent=0 // pred_fallthru
    _

</llo_original>
